<compile_context>
chip_gen: v7x
topology: tpu7x:2x2x1
jax: 0.10.0
libtpu: 0.0.40
codegen_flags: <defaults>
</compile_context>

<pallas_src>
import functools

import jax
import jax.numpy as jnp
from jax.experimental import pallas as pl
from jax.experimental.pallas import tpu as pltpu

EPS = 1e-5
LANE = 128


def _round_up(x, m):
    return (x + m - 1) // m * m


def _vmem_limit_bytes():
    # v5e/v6e: 128 MiB physical VMEM -> 96 MiB scoped; v7x: 64 MiB -> 48 MiB.
    cap = 64 * 1024 * 1024
    try:
        cap = int(pltpu.get_tpu_info().vmem_capacity_bytes)
    except Exception:
        pass
    return min(cap * 3 // 4, 96 * 1024 * 1024)


def _divisors(k):
    return [d for d in range(1, k + 1) if k % d == 0]


def _pick_tc_single_pass(c_pad, n_rows, in_bytes, out_bytes, budget):
    """Channel tile for Path A: divisor of c_pad, >=2 (ideally >=4) tiles, fits budget."""
    if c_pad <= LANE:
        return c_pad
    k = c_pad // LANE
    min_tiles = 4 if k >= 4 else 2
    per_col = n_rows * (2 * (in_bytes + out_bytes) + 8)  # dbl-buffered in/out + f32 temp
    best = LANE
    for d in _divisors(k):
        tc = LANE * d
        if k // d < min_tiles:
            break
        if tc * per_col <= budget:
            best = tc
    return best


def _pick_tc_two_pass(c_pad):
    """Channel tile for Path B: divisor of c_pad, <=512, keep >=2 tiles when possible."""
    if c_pad <= LANE:
        return c_pad
    k = c_pad // LANE
    best = 1
    for d in _divisors(k):
        if d <= 4 and k // d >= 2:
            best = d
    return LANE * best


# ---------------- Path A: single fused pass (channel-tiled) ----------------
def _bn_fused_kernel(x_ref, gamma_ref, beta_ref, o_ref, *, n_rows, eps):
    # x_ref: (N, TC) full column of rows for TC channels; gamma/beta: (1, TC) f32.
    inv_n = jnp.float32(1.0 / n_rows)
    mean = jnp.sum(x_ref[...], axis=0, keepdims=True, dtype=jnp.float32) * inv_n
    xc = x_ref[...].astype(jnp.float32) - mean          # centered (better numerics)
    var = jnp.sum(xc * xc, axis=0, keepdims=True) * inv_n
    scale = gamma_ref[...] * jax.lax.rsqrt(var + jnp.float32(eps))   # EUP rsqrt
    o_ref[...] = (xc * scale + beta_ref[...]).astype(o_ref.dtype)


# ---------------- Path B: two-pass (stats kernel + normalize kernel) ----------------
def _bn_stats_kernel(x_ref, sum_ref, sq_ref, *, n_rows, tn):
    # grid = (C_tiles, N_tiles); rows (reduction) axis last & "arbitrary";
    # sum/sq output blocks are resident accumulators across the row axis.
    ni = pl.program_id(1)

    @pl.when(ni == 0)
    def _():
        sum_ref[...] = jnp.zeros_like(sum_ref)
        sq_ref[...] = jnp.zeros_like(sq_ref)

    def _acc(xf):
        sum_ref[...] += jnp.sum(xf, axis=0, keepdims=True)
        sq_ref[...] += jnp.sum(xf * xf, axis=0, keepdims=True)

    rem = n_rows % tn  # static
    if rem == 0:
        _acc(x_ref[...].astype(jnp.float32))
    else:
        last = pl.num_programs(1) - 1

        @pl.when(ni != last)
        def _():
            _acc(x_ref[...].astype(jnp.float32))

        @pl.when(ni == last)
        def _():
            rows = jax.lax.broadcasted_iota(jnp.int32, x_ref.shape, 0)
            _acc(jnp.where(rows < rem, x_ref[...].astype(jnp.float32), 0.0))


def _bn_apply_kernel(x_ref, scale_ref, shift_ref, o_ref):
    o_ref[...] = (x_ref[...].astype(jnp.float32) * scale_ref[...]
                  + shift_ref[...]).astype(o_ref.dtype)


def batch_norm_1d(x, gamma, beta, *, eps=EPS, single_pass_budget_bytes=None):
    """x: (B, T, C) or (B, C). gamma/beta: (C,). Returns same shape/dtype as x."""
    orig_shape = x.shape
    C = orig_shape[-1]
    x2d = x.reshape(-1, C)              # (N, C): reduce over batch (and time)
    N = x2d.shape[0]
    out_dtype = x.dtype
    if N == 0:
        return x

    vmem_limit = _vmem_limit_bytes()
    if single_pass_budget_bytes is None:
        single_pass_budget_bytes = int(vmem_limit * 0.8)

    in_bytes = x2d.dtype.itemsize
    out_bytes = x.dtype.itemsize
    per_elem = 2 * (in_bytes + out_bytes) + 8   # dbl-buffered in/out + f32 temp margin

    # Channel-tiling policy (no padding of the slab, ever):
    #   C < 128  -> full-dim channel block (explicitly legal block shape)
    #   C >= 128 -> tiles are multiples of 128 dividing round_up(C,128); the last tile's
    #               <=127-lane overrun lives in the (8,128) layout padding of the buffer.
    c_pad = C if C < LANE else _round_up(C, LANE)

    gamma2d = jnp.pad(gamma.reshape(1, C).astype(jnp.float32), ((0, 0), (0, c_pad - C)))
    beta2d = jnp.pad(beta.reshape(1, C).astype(jnp.float32), ((0, 0), (0, c_pad - C)))

    tc_min = min(c_pad, LANE)
    fits_single = N * tc_min * per_elem <= single_pass_budget_bytes

    if fits_single:
        # ---------- Path A: single fused pass ----------
        tc = _pick_tc_single_pass(c_pad, N, in_bytes, out_bytes, single_pass_budget_bytes)
        n_ct = c_pad // tc
        out = pl.pallas_call(
            functools.partial(_bn_fused_kernel, n_rows=N, eps=eps),
            out_shape=jax.ShapeDtypeStruct((N, C), out_dtype),
            grid_spec=pltpu.PrefetchScalarGridSpec(
                num_scalar_prefetch=0,
                grid=(n_ct,),
                in_specs=[
                    pl.BlockSpec((N, tc), lambda c: (0, c)),
                    pl.BlockSpec((1, tc), lambda c: (0, c)),
                    pl.BlockSpec((1, tc), lambda c: (0, c)),
                ],
                out_specs=pl.BlockSpec((N, tc), lambda c: (0, c)),
            ),
            compiler_params=pltpu.CompilerParams(
                dimension_semantics=("parallel",),
                vmem_limit_bytes=vmem_limit),
            cost_estimate=pl.CostEstimate(
                flops=int(6 * N * c_pad),
                transcendentals=int(c_pad),
                bytes_accessed=int(N * C * (in_bytes + out_bytes))),
        )(x2d, gamma2d, beta2d)
    else:
        # ---------- Path B: two-pass (stats + normalize) ----------
        tc = _pick_tc_two_pass(c_pad)
        n_ct = c_pad // tc
        # dtype-aware sublane packing: 8 f32 / 16 bf16 / 32 int8
        sub = max(8, 8 * (4 // in_bytes))
        target_block = 4 * 1024 * 1024          # >=4 MiB blocks amortize per-step overhead
        tn = max(sub, (target_block // (tc * in_bytes)) // sub * sub)
        tn = min(tn, _round_up(N, sub))
        n_rt = pl.cdiv(N, tn)

        # TODO(synk): on v7x, when c_pad == tc (single channel tile) the stats pass runs
        # on one TensorCore; a leading core-split over rows with partial sums would help.
        sums, sqs = pl.pallas_call(
            functools.partial(_bn_stats_kernel, n_rows=N, tn=tn),
            out_shape=(jax.ShapeDtypeStruct((1, c_pad), jnp.float32),
                       jax.ShapeDtypeStruct((1, c_pad), jnp.float32)),
            grid_spec=pltpu.PrefetchScalarGridSpec(
                num_scalar_prefetch=0,
                grid=(n_ct, n_rt),
                in_specs=[pl.BlockSpec((tn, tc), lambda c, n: (n, c))],
                out_specs=[pl.BlockSpec((1, tc), lambda c, n: (0, c)),
                           pl.BlockSpec((1, tc), lambda c, n: (0, c))],
            ),
            compiler_params=pltpu.CompilerParams(
                dimension_semantics=("parallel", "arbitrary"),
                vmem_limit_bytes=vmem_limit),
            cost_estimate=pl.CostEstimate(
                flops=int(3 * N * c_pad),
                transcendentals=0,
                bytes_accessed=int(N * C * in_bytes + 8 * c_pad)),
        )(x2d)

        inv_n = jnp.float32(1.0 / N)
        mean = sums * inv_n
        var = jnp.maximum(sqs * inv_n - mean * mean, 0.0)     # biased variance
        scale = gamma2d * jax.lax.rsqrt(var + jnp.float32(eps))
        shift = beta2d - mean * scale

        out = pl.pallas_call(
            _bn_apply_kernel,
            out_shape=jax.ShapeDtypeStruct((N, C), out_dtype),
            grid_spec=pltpu.PrefetchScalarGridSpec(
                num_scalar_prefetch=0,
                grid=(n_ct, n_rt),                 # channels outer, rows inner (fastest)
                in_specs=[pl.BlockSpec((tn, tc), lambda c, n: (n, c)),
                          pl.BlockSpec((1, tc), lambda c, n: (0, c)),
                          pl.BlockSpec((1, tc), lambda c, n: (0, c))],
                out_specs=pl.BlockSpec((tn, tc), lambda c, n: (n, c)),
            ),
            compiler_params=pltpu.CompilerParams(
                dimension_semantics=("parallel", "parallel"),
                vmem_limit_bytes=vmem_limit),
            cost_estimate=pl.CostEstimate(
                flops=int(2 * N * c_pad),
                transcendentals=0,
                bytes_accessed=int(N * C * (in_bytes + out_bytes) + 8 * c_pad)),
        )(x2d, scale, shift)

    # TODO(synk): running_mean/running_var momentum updates (training side-effect) and
    # eval-mode normalization with running stats / affine=False are not produced here.
    return out.reshape(orig_shape)


if __name__ == "__main__":
    key = jax.random.PRNGKey(0)
    k1, k2, k3, k4, k5 = jax.random.split(key, 5)

    def ref_bn(xin, g, b):
        c = xin.shape[-1]
        x2 = xin.reshape(-1, c).astype(jnp.float32)
        m = jnp.mean(x2, axis=0)
        v = jnp.mean((x2 - m) ** 2, axis=0)
        return ((x2 - m) * jax.lax.rsqrt(v + EPS) * g + b).reshape(xin.shape)

    # 3D (batch, time, channels), C < 128 -> full-dim channel block; Path A
    B, T, C = 4, 8, 32
    x = jax.random.normal(k1, (B, T, C), dtype=jnp.float32)
    gamma = 0.5 + jax.random.uniform(k2, (C,), dtype=jnp.float32)
    beta = 0.1 * jax.random.normal(k3, (C,), dtype=jnp.float32)

    y = jax.block_until_ready(batch_norm_1d(x, gamma, beta))
    assert y.shape == x.shape and y.dtype == x.dtype
    assert jnp.max(jnp.abs(y - ref_bn(x, gamma, beta))) < 2e-4

    # Same input forced onto the two-pass path (stats + apply, ragged row block)
    y2 = jax.block_until_ready(batch_norm_1d(x, gamma, beta, single_pass_budget_bytes=0))
    assert jnp.max(jnp.abs(y2 - ref_bn(x, gamma, beta))) < 2e-4

    # 2D (batch, channels) with C not a multiple of 128: no pad/slice, last channel tile
    # overruns only into the layout padding.  Both paths checked.
    B2, C2 = 100, 160
    x2 = jax.random.normal(k4, (B2, C2), dtype=jnp.float32)
    g2 = 0.5 + jax.random.uniform(k2, (C2,), dtype=jnp.float32)
    b2 = 0.1 * jax.random.normal(k3, (C2,), dtype=jnp.float32)
    y3 = jax.block_until_ready(batch_norm_1d(x2, g2, b2))
    assert y3.shape == x2.shape
    assert jnp.max(jnp.abs(y3 - ref_bn(x2, g2, b2))) < 2e-4
    y4 = jax.block_until_ready(batch_norm_1d(x2, g2, b2, single_pass_budget_bytes=0))
    assert jnp.max(jnp.abs(y4 - ref_bn(x2, g2, b2))) < 2e-4

    # bf16 input (Path A), f32 statistics accumulation inside the kernel
    Cb = 64
    xb32 = jax.random.normal(k5, (2, 16, Cb), dtype=jnp.float32)
    gb = 0.5 + jax.random.uniform(k2, (Cb,), dtype=jnp.float32)
    bb = 0.1 * jax.random.normal(k3, (Cb,), dtype=jnp.float32)
    xb = xb32.astype(jnp.bfloat16)
    yb = jax.block_until_ready(batch_norm_1d(xb, gb, bb))
    assert yb.dtype == jnp.bfloat16 and yb.shape == xb.shape
    refb = ref_bn(xb.astype(jnp.float32), gb, bb)
    assert jnp.max(jnp.abs(yb.astype(jnp.float32) - refb)) < 6e-2

    print("KERNEL_OK")
</pallas_src>

<mosaic_0001>
module attributes {stable_mosaic.version = 11 : i64} {
  func.func @_bn_fused_kernel(%arg0: i32, %arg1: memref<32x32xf32, #tpu.memory_space<vmem>>, %arg2: memref<1x32xf32, #tpu.memory_space<vmem>>, %arg3: memref<1x32xf32, #tpu.memory_space<vmem>>, %arg4: memref<32x32xf32, #tpu.memory_space<vmem>>) attributes {dimension_semantics = [#tpu.dimension_semantics<parallel>], iteration_bounds = array<i64: 1>, scalar_prefetch = 0 : i64, scratch_operands = 0 : i64, tpu.core_type = #tpu.core_type<tc>, window_params = [{transform_indices = @transform_0, window_bounds = array<i64: 32, 32>}, {transform_indices = @transform_1, window_bounds = array<i64: 1, 32>}, {transform_indices = @transform_2, window_bounds = array<i64: 1, 32>}, {transform_indices = @transform_3, window_bounds = array<i64: 32, 32>}]} {
    %c0 = arith.constant 0 : index
    %c0_0 = arith.constant 0 : index
    %0 = vector.load %arg1[%c0, %c0_0] : memref<32x32xf32, #tpu.memory_space<vmem>>, vector<32x32xf32>
    %cst = arith.constant dense<0.000000e+00> : vector<32xf32>
    %1 = vector.multi_reduction <add>, %0, %cst [0] : vector<32x32xf32> to vector<32xf32>
    %2 = vector.shape_cast %1 : vector<32xf32> to vector<1x32xf32>
    %cst_1 = arith.constant 3.125000e-02 : f32
    %3 = vector.broadcast %cst_1 : f32 to vector<1x32xf32>
    %4 = arith.mulf %2, %3 : vector<1x32xf32>
    %c0_2 = arith.constant 0 : index
    %c0_3 = arith.constant 0 : index
    %5 = vector.load %arg1[%c0_2, %c0_3] : memref<32x32xf32, #tpu.memory_space<vmem>>, vector<32x32xf32>
    %6 = vector.broadcast %4 : vector<1x32xf32> to vector<32x32xf32>
    %7 = arith.subf %5, %6 : vector<32x32xf32>
    %8 = arith.mulf %7, %7 : vector<32x32xf32>
    %cst_4 = arith.constant dense<0.000000e+00> : vector<32xf32>
    %9 = vector.multi_reduction <add>, %8, %cst_4 [0] : vector<32x32xf32> to vector<32xf32>
    %10 = vector.shape_cast %9 : vector<32xf32> to vector<1x32xf32>
    %cst_5 = arith.constant 3.125000e-02 : f32
    %11 = vector.broadcast %cst_5 : f32 to vector<1x32xf32>
    %12 = arith.mulf %10, %11 : vector<1x32xf32>
    %c0_6 = arith.constant 0 : index
    %c0_7 = arith.constant 0 : index
    %13 = vector.load %arg2[%c0_6, %c0_7] : memref<1x32xf32, #tpu.memory_space<vmem>>, vector<1x32xf32>
    %cst_8 = arith.constant 9.99999974E-6 : f32
    %14 = vector.broadcast %cst_8 : f32 to vector<1x32xf32>
    %15 = arith.addf %12, %14 : vector<1x32xf32>
    %16 = math.rsqrt %15 : vector<1x32xf32>
    %17 = arith.mulf %13, %16 : vector<1x32xf32>
    %18 = vector.broadcast %17 : vector<1x32xf32> to vector<32x32xf32>
    %19 = arith.mulf %7, %18 : vector<32x32xf32>
    %c0_9 = arith.constant 0 : index
    %c0_10 = arith.constant 0 : index
    %20 = vector.load %arg3[%c0_9, %c0_10] : memref<1x32xf32, #tpu.memory_space<vmem>>, vector<1x32xf32>
    %21 = vector.broadcast %20 : vector<1x32xf32> to vector<32x32xf32>
    %22 = arith.addf %19, %21 : vector<32x32xf32>
    %c0_11 = arith.constant 0 : index
    %c0_12 = arith.constant 0 : index
    %23 = vector.load %arg4[%c0_11, %c0_12] : memref<32x32xf32, #tpu.memory_space<vmem>>, vector<32x32xf32>
    tpu.vector_store %arg4[%c0_11, %c0_12], %22 {strides = array<i32>} : memref<32x32xf32, #tpu.memory_space<vmem>>, vector<32x32xf32>,
    return
  }
  func.func @transform_0(%arg0: i32) -> (i32, i32) {
    %c0_i32 = arith.constant 0 : i32
    %c0_i32_0 = arith.constant 0 : i32
    return %c0_i32, %arg0 : i32, i32
  }
  func.func @transform_1(%arg0: i32) -> (i32, i32) {
    %c0_i32 = arith.constant 0 : i32
    %c0_i32_0 = arith.constant 0 : i32
    return %c0_i32, %arg0 : i32, i32
  }
  func.func @transform_2(%arg0: i32) -> (i32, i32) {
    %c0_i32 = arith.constant 0 : i32
    %c0_i32_0 = arith.constant 0 : i32
    return %c0_i32, %arg0 : i32, i32
  }
  func.func @transform_3(%arg0: i32) -> (i32, i32) {
    %c0_i32 = arith.constant 0 : i32
    %c0_i32_0 = arith.constant 0 : i32
    return %c0_i32, %arg0 : i32, i32
  }
}

</mosaic_0001>

<llo_original>
// kernel: tpu_custom_call.1
$region0: #{tpu_custom_call.1}
  #allocation0 [shape = 'u32[]', space=smem, size = 0x4, offset = 0x4, fixed_abs, tag = 'smem constant byte address 0x4 - core index']
  #allocation1 [shape = 'u32[144,128]{1,0:T(1,128)}', space=vmem, size = 0x12000, scoped, tag = 'internal scratch']
  %s0 = inlined_call_operand.hbm [shape: f32[32,32], index: 0, kind: input, shape index: {}]
  %s1 = inlined_call_operand.vmem [shape: f32[1,32], index: 1, kind: input, shape index: {}]
  %s2 = inlined_call_operand.vmem [shape: f32[1,32], index: 2, kind: input, shape index: {}]
  %s3 = inlined_call_operand.hbm [shape: f32[32,32], index: 3, kind: output, shape index: {}]
  %s4 = sld [smem:[#allocation0]]
  $region26: #{tpu_custom_call.1} parent=0
    _
  %s6 = ssub.s32 1, %s4
  %s7 = scalar_select 0, %s6, %s4
  $region1: #{tpu_custom_call.1} parent=0
    #allocation2 [shape = 'u8[16384]{0}', space=vmem, size = 0x4000, scoped, tag = 'input window, operand 0, single buffered']
    #allocation3 [shape = 's32[1]{0}', space=sflag, size = 0x4, scoped, tag = 'scoped memory for tpu_custom_call.1']
    #allocation4 [shape = 's32[1]{0}', space=sflag, size = 0x4, scoped, tag = 'scoped memory for tpu_custom_call.1']
    #allocation5 [shape = 'u8[16384]{0}', space=vmem, size = 0x4000, scoped, tag = 'output window, operand 0, single buffered']
    %8 = vsyncpa [#allocation3], 0
    %9 = vsyncpa [#allocation4], 0
    // Predicated region
    $region2: #{tpu_custom_call.1} parent=1 // pred_check
      _
    $region3: #{tpu_custom_call.1} parent=1 // pred_check_branch
      %11 = sbr.rel (0) target = $region5
    $region4: #{tpu_custom_call.1} parent=1 // pred_region
      %s13 = ssub.s32 512, 512
      %14 = vsyncadd [#allocation3], %s13
      %s15 = sshll.u32 [#allocation2], 4
      %s16 = int_to_ptr.vmem [resolvable:$true] %s15
      %21 = dma.hbm_to_vmem [thread:$0]  %s0, 512, %s16, [#allocation3], 128, 128, 8
    $region5: #{tpu_custom_call.1} parent=1 // pred_fallthru
      _
    // Predicated region
    $region6: #{tpu_custom_call.1} parent=1 // pred_check
      _
    $region7: #{tpu_custom_call.1} parent=1 // pred_check_branch
      %23 = sbr.rel (0) target = $region9
    $region8: #{tpu_custom_call.1} parent=1 // pred_region
      _
    $region9: #{tpu_custom_call.1} parent=1 // pred_fallthru
      _
    // Predicated region
    $region10: #{tpu_custom_call.1} parent=1 // pred_check
      _
    $region11: #{tpu_custom_call.1} parent=1 // pred_check_branch
      %25 = sbr.rel (0) target = $region13
    $region12: #{tpu_custom_call.1} parent=1 // pred_region
      _
    $region13: #{tpu_custom_call.1} parent=1 // pred_fallthru
      _
    // Predicated region
    $region14: #{tpu_custom_call.1} parent=1 // pred_check
      _
    $region15: #{tpu_custom_call.1} parent=1 // pred_check_branch
      %27 = sbr.rel (0) target = $region17
    $region16: #{tpu_custom_call.1} parent=1 // pred_region
      %28 = dma.done [#allocation3], 512
    $region17: #{tpu_custom_call.1} parent=1 // pred_fallthru
      _
    %v29 = vld [vmem:[#allocation2] sm:$0xff]
    %v30 = vld [vmem:[#allocation2 + $0x8] sm:$0xff]
    %v31 = vld [vmem:[#allocation2 + $0x10] sm:$0xff]
    %v32 = vld [vmem:[#allocation2 + $0x18] sm:$0xff]
    %vm33 = vcmask 261120
    %v34 = vsel %vm33, %v29, 0.0
    %v35 = vsel %vm33, %v30, 0.0
    %v36 = vadd.f32 %v34, %v35
    %v37 = vsel %vm33, %v31, 0.0
    %v38 = vadd.f32 %v36, %v37
    %v39 = vsel %vm33, %v32, 0.0
    %v40 = vadd.f32 %v38, %v39
    %v41 = vrot.slane %v40, 4
    %v42 = vadd.f32 %v40, %v41
    %v43 = vrot.slane %v42, 2
    %v44 = vadd.f32 %v42, %v43
    %v45 = vrot.slane %v44, 1
    %v46 = vadd.f32 %v44, %v45
    %v47 = vmul.f32 %v46, 0.03125
    %v48 = vsub.f32 %v29, %v47
    %v49 = vsub.f32 %v30, %v47
    %v50 = vsub.f32 %v31, %v47
    %v51 = vsub.f32 %v32, %v47
    %v52 = vmul.f32 %v48, %v48
    %v53 = vmul.f32 %v49, %v49
    %v54 = vmul.f32 %v50, %v50
    %v55 = vmul.f32 %v51, %v51
    %v56 = vsel %vm33, %v52, 0.0
    %v57 = vsel %vm33, %v53, 0.0
    %v58 = vadd.f32 %v56, %v57
    %v59 = vsel %vm33, %v54, 0.0
    %v60 = vadd.f32 %v58, %v59
    %v61 = vsel %vm33, %v55, 0.0
    %v62 = vadd.f32 %v60, %v61
    %v63 = vrot.slane %v62, 4
    %v64 = vadd.f32 %v62, %v63
    %v65 = vrot.slane %v64, 2
    %v66 = vadd.f32 %v64, %v65
    %v67 = vrot.slane %v66, 1
    %v68 = vadd.f32 %v66, %v67
    %v69 = vmul.f32 %v68, 0.03125
    %v70 = vld [vmem:[%s1] sm:$0x1]
    %v71 = vadd.f32 %v69, 1e-05
    %v72 = vrsqrt.pop %v71
    %v73 = vmul.f32 %v70, %v72
    %v75 = vlaneseq
    %v76 = vshrl.u32 %v75, 7
    %v77 = vsub.s32 0, %v76
    %v78 = vrot.slane %v73, %v77
    %v80 = vmul.f32 %v48, %v78
    %v81 = vmul.f32 %v49, %v78
    %v82 = vmul.f32 %v50, %v78
    %v83 = vmul.f32 %v51, %v78
    %v84 = vld [vmem:[%s2] sm:$0x1]
    %v86 = vlaneseq
    %v87 = vshrl.u32 %v86, 7
    %v88 = vsub.s32 0, %v87
    %v89 = vrot.slane %v84, %v88
    %v91 = vadd.f32 %v80, %v89
    %v92 = vadd.f32 %v81, %v89
    %v93 = vadd.f32 %v82, %v89
    %v94 = vadd.f32 %v83, %v89
    %95 = vst.msk [vmem:[#allocation5] sm:$0xff] %vm33, %v91
    %96 = vst.msk [vmem:[#allocation5 + $0x8] sm:$0xff] %vm33, %v92
    %97 = vst.msk [vmem:[#allocation5 + $0x10] sm:$0xff] %vm33, %v93
    %98 = vst.msk [vmem:[#allocation5 + $0x18] sm:$0xff] %vm33, %v94
    // Predicated region
    $region18: #{tpu_custom_call.1} parent=1 // pred_check
      _
    $region19: #{tpu_custom_call.1} parent=1 // pred_check_branch
      %100 = sbr.rel (0) target = $region21
    $region20: #{tpu_custom_call.1} parent=1 // pred_region
      %s102 = ssub.s32 512, 512
      %103 = vsyncadd [#allocation4], %s102
      %s104 = sshll.u32 [#allocation5], 4
      %s105 = int_to_ptr.vmem [resolvable:$true] %s104
      %110 = dma.vmem_to_hbm [thread:$0]  %s105, 512, %s3, [#allocation4], 128, 128, 8
    $region21: #{tpu_custom_call.1} parent=1 // pred_fallthru
      _
    // Predicated region
    $region22: #{tpu_custom_call.1} parent=1 // pred_check
      _
    $region23: #{tpu_custom_call.1} parent=1 // pred_check_branch
      %112 = sbr.rel (0) target = $region25
    $region24: #{tpu_custom_call.1} parent=1 // pred_region
      %113 = dma.done [#allocation4], 512
    $region25: #{tpu_custom_call.1} parent=1 // pred_fallthru
      _
    %114 = vsyncpa [#allocation3], 1
    %115 = vsyncpa [#allocation4], 1

</llo_original>
